<compile_context>
chip_gen: v7x
topology: tpu7x:2x2x1
jax: 0.10.0
libtpu: 0.0.40
codegen_flags: <defaults>
</compile_context>

<pallas_src>
import functools

import jax
import jax.numpy as jnp
from jax import lax
from jax.experimental import pallas as pl
from jax.experimental.pallas import tpu as pltpu

_LANE = 128


def _round_up(x, m):
    return ((x + m - 1) // m) * m


# ----------------------------- kernel ---------------------------------------

def acmodel_kernel(n_actions, obs_ref, w1_ref, b1_ref, w2_ref, b2_ref,
                   logp_ref, value_ref):
    x = obs_ref[...]                       # (E, TB)   batch on lanes
    e_dim = x.shape[0]

    # Fused first layers (actor | critic): K = E = 2 is far too small for the MXU,
    # so use VPU broadcast multiply-adds (outer products) instead.
    h_pre = w1_ref[:, 0:1] * x[0:1, :]                              # (2H, TB)
    for e in range(1, e_dim):
        h_pre = h_pre + w1_ref[:, e:e + 1] * x[e:e + 1, :]
    h = jnp.tanh(h_pre + b1_ref[...])                               # (128, TB)

    # Fused block-diagonal second layers on the MXU: rows 0..A-1 = actor logits,
    # row A = critic value, remaining (padded) rows are exactly zero.
    y = jnp.dot(w2_ref[...], h, preferred_element_type=jnp.float32) + b2_ref[...]
    # y: (8, TB)

    row = lax.broadcasted_iota(jnp.int32, y.shape, dimension=0)     # (8, TB)
    logit_mask = row < n_actions

    # log_softmax over the logit rows only; masked rows use a finite -inf so their
    # exp underflows to exactly 0.  The reduction is over sublanes, so exp/log are
    # lane-dense (128 batch elements per vreg lane).
    logits = jnp.where(logit_mask, y, -1e30)
    m = jnp.max(logits, axis=0, keepdims=True)                      # (1, TB)
    z = logits - m
    lse = jnp.log(jnp.sum(jnp.exp(z), axis=0, keepdims=True))       # (1, TB)
    logp = z - lse                                                  # (8, TB)

    logp_ref[...] = logp[:n_actions, :]                             # (A, TB)
    # Extract the value row with a masked sublane reduce (avoids offset slicing).
    value_ref[...] = jnp.sum(jnp.where(row == n_actions, y, 0.0),
                             axis=0, keepdims=True)                 # (1, TB)


# ----------------------------- wrapper ---------------------------------------

def acmodel_forward(obs, packed, *, n_actions, block_b=4096):
    """Returns (log_probs (B, A), value (B,)) from packed/fused parameters."""
    B, E = obs.shape

    # Batch lives on the lane dimension inside the kernel.
    obs_t = obs.T                                                   # (E, B)

    if B <= 256:
        # Single tile: block == full array, no alignment constraints; the kernel
        # launch/pipeline warmup dominates at this size anyway.
        tb = b_pad = B
    else:
        # 128-aligned tiles, at least 2 of them so a v7x megacore can split the
        # "parallel" batch axis across both TensorCores.
        tb = min(block_b, _round_up(-(-B // 2), _LANE))
        b_pad = _round_up(B, tb)

    if b_pad != B:
        obs_t = jnp.pad(obs_t, ((0, 0), (0, b_pad - B)))

    kernel = functools.partial(acmodel_kernel, n_actions)
    logp_t, value_t = pl.pallas_call(
        kernel,
        out_shape=(jax.ShapeDtypeStruct((n_actions, b_pad), jnp.float32),
                   jax.ShapeDtypeStruct((1, b_pad), jnp.float32)),
        grid=(b_pad // tb,),
        in_specs=[
            pl.BlockSpec((E, tb), lambda i: (0, i)),                 # obs tile
            pl.BlockSpec(packed["w1"].shape, lambda i: (0, 0)),      # resident weights
            pl.BlockSpec(packed["b1"].shape, lambda i: (0, 0)),
            pl.BlockSpec(packed["w2"].shape, lambda i: (0, 0)),
            pl.BlockSpec(packed["b2"].shape, lambda i: (0, 0)),
        ],
        out_specs=(pl.BlockSpec((n_actions, tb), lambda i: (0, i)),
                   pl.BlockSpec((1, tb), lambda i: (0, i))),
        compiler_params=pltpu.CompilerParams(
            dimension_semantics=("parallel",)),
    )(obs_t, packed["w1"], packed["b1"], packed["w2"], packed["b2"])

    logp = logp_t[:, :B].T                                          # (B, A)
    value = value_t[0, :B]                                          # (B,)
    return logp, value


# ----------------------------- params ----------------------------------------

def init_linear(key, in_features, out_features):
    """Mirrors init_params: W ~ N(0,1), row-normalized over input dim; bias = 0.

    Returns W in torch orientation (out, in) and bias (out,).
    """
    w = jax.random.normal(key, (out_features, in_features), dtype=jnp.float32)
    w = w / jnp.sqrt(jnp.sum(w * w, axis=1, keepdims=True))
    b = jnp.zeros((out_features,), dtype=jnp.float32)
    return w, b


def make_params(key, embedding_size=2, n_actions=4, hidden=64):
    k1, k2, k3, k4 = jax.random.split(key, 4)
    w1a, b1a = init_linear(k1, embedding_size, hidden)
    w2a, b2a = init_linear(k2, hidden, n_actions)
    w1c, b1c = init_linear(k3, embedding_size, hidden)
    w2c, b2c = init_linear(k4, hidden, 1)
    return dict(w1a=w1a, b1a=b1a, w2a=w2a, b2a=b2a,
                w1c=w1c, b1c=b1c, w2c=w2c, b2c=b2c)


def pack_params(p):
    """One-time fusion of actor/critic weights for the transposed kernel."""
    H, E = p["w1a"].shape
    A = p["w2a"].shape[0]
    out_rows = _round_up(A + 1, 8)

    # First layers stacked: (2H, E) and (2H, 1).
    w1 = jnp.concatenate([p["w1a"], p["w1c"]], axis=0)
    b1 = jnp.concatenate([p["b1a"], p["b1c"]], axis=0)[:, None]

    # Second layers block-diagonal, zero-padded to 8 output rows: (8, 2H), (8, 1).
    w2 = jnp.zeros((out_rows, 2 * H), jnp.float32)
    w2 = w2.at[:A, :H].set(p["w2a"])
    w2 = w2.at[A, H:].set(p["w2c"][0])
    b2 = jnp.zeros((out_rows, 1), jnp.float32)
    b2 = b2.at[:A, 0].set(p["b2a"])
    b2 = b2.at[A, 0].set(p["b2c"][0])
    return dict(w1=w1, b1=b1, w2=w2, b2=b2)


def reference_forward(obs, p):
    """Plain-JAX reference (unfused, exact f32 elementwise math)."""
    ha = jnp.tanh((obs[:, None, :] * p["w1a"][None, :, :]).sum(-1) + p["b1a"])
    logits = (ha[:, None, :] * p["w2a"][None, :, :]).sum(-1) + p["b2a"]
    logp = jax.nn.log_softmax(logits, axis=1)
    hc = jnp.tanh((obs[:, None, :] * p["w1c"][None, :, :]).sum(-1) + p["b1c"])
    val = ((hc[:, None, :] * p["w2c"][None, :, :]).sum(-1) + p["b2c"])[:, 0]
    return logp, val


# ----------------------------- demo / check -----------------------------------

if __name__ == "__main__":
    key = jax.random.PRNGKey(0)
    kp, kx1, kx2 = jax.random.split(key, 3)

    E, A, H = 2, 4, 64
    params = make_params(kp, embedding_size=E, n_actions=A, hidden=H)
    packed = pack_params(params)

    fwd = jax.jit(functools.partial(acmodel_forward, n_actions=A))

    # RL-step-sized batch: single tile, one grid step.
    obs8 = jax.random.normal(kx1, (8, E), dtype=jnp.float32)
    logp8, val8 = fwd(obs8, packed)
    jax.block_until_ready((logp8, val8))
    ref_logp8, ref_val8 = reference_forward(obs8, params)
    assert logp8.shape == (8, A) and val8.shape == (8,)
    assert jnp.allclose(logp8, ref_logp8, atol=2e-5, rtol=2e-5)
    assert jnp.allclose(val8, ref_val8, atol=2e-5, rtol=2e-5)

    # Rollout-style batch: 128-aligned tiles, 2-step "parallel" grid, padded columns.
    obs300 = jax.random.normal(kx2, (300, E), dtype=jnp.float32)
    logp300, val300 = fwd(obs300, packed)
    jax.block_until_ready((logp300, val300))
    ref_logp300, ref_val300 = reference_forward(obs300, params)
    assert logp300.shape == (300, A) and val300.shape == (300,)
    assert jnp.allclose(logp300, ref_logp300, atol=2e-5, rtol=2e-5)
    assert jnp.allclose(val300, ref_val300, atol=2e-5, rtol=2e-5)

    # TODO(synk): Categorical distribution object construction (sampling/entropy)
    # has no Pallas equivalent; the kernel returns its log-prob parameterization.
    print("KERNEL_OK")
</pallas_src>

<mosaic_0001>
module attributes {stable_mosaic.version = 11 : i64} {
  func.func @acmodel_kernel(%arg0: i32, %arg1: memref<2x8xf32, #tpu.memory_space<vmem>>, %arg2: memref<128x2xf32, #tpu.memory_space<vmem>>, %arg3: memref<128x1xf32, #tpu.memory_space<vmem>>, %arg4: memref<8x128xf32, #tpu.memory_space<vmem>>, %arg5: memref<8x1xf32, #tpu.memory_space<vmem>>, %arg6: memref<4x8xf32, #tpu.memory_space<vmem>>, %arg7: memref<1x8xf32, #tpu.memory_space<vmem>>) attributes {dimension_semantics = [#tpu.dimension_semantics<parallel>], iteration_bounds = array<i64: 1>, scalar_prefetch = 0 : i64, scratch_operands = 0 : i64, tpu.core_type = #tpu.core_type<tc>, window_params = [{transform_indices = @transform_0, window_bounds = array<i64: 2, 8>}, {pipeline_mode = #tpu.pipeline_mode<synchronous>, transform_indices = @transform_1, window_bounds = array<i64: 128, 2>}, {pipeline_mode = #tpu.pipeline_mode<synchronous>, transform_indices = @transform_2, window_bounds = array<i64: 128, 1>}, {pipeline_mode = #tpu.pipeline_mode<synchronous>, transform_indices = @transform_3, window_bounds = array<i64: 8, 128>}, {pipeline_mode = #tpu.pipeline_mode<synchronous>, transform_indices = @transform_4, window_bounds = array<i64: 8, 1>}, {transform_indices = @transform_5, window_bounds = array<i64: 4, 8>}, {transform_indices = @transform_6, window_bounds = array<i64: 1, 8>}]} {
    %c0 = arith.constant 0 : index
    %c0_0 = arith.constant 0 : index
    %0 = vector.load %arg1[%c0, %c0_0] : memref<2x8xf32, #tpu.memory_space<vmem>>, vector<2x8xf32>
    %c0_1 = arith.constant 0 : index
    %c0_2 = arith.constant 0 : index
    %1 = vector.load %arg2[%c0_1, %c0_2] : memref<128x2xf32, #tpu.memory_space<vmem>>, vector<128x1xf32>
    %2 = vector.extract_strided_slice %0 {offsets = [0, 0], sizes = [1, 8], strides = [1, 1]} : vector<2x8xf32> to vector<1x8xf32>
    %3 = vector.broadcast %1 : vector<128x1xf32> to vector<128x8xf32>
    %4 = vector.broadcast %2 : vector<1x8xf32> to vector<128x8xf32>
    %5 = arith.mulf %3, %4 : vector<128x8xf32>
    %c0_3 = arith.constant 0 : index
    %c1 = arith.constant 1 : index
    %6 = vector.load %arg2[%c0_3, %c1] : memref<128x2xf32, #tpu.memory_space<vmem>>, vector<128x1xf32>
    %7 = vector.extract_strided_slice %0 {offsets = [1, 0], sizes = [1, 8], strides = [1, 1]} : vector<2x8xf32> to vector<1x8xf32>
    %8 = vector.broadcast %6 : vector<128x1xf32> to vector<128x8xf32>
    %9 = vector.broadcast %7 : vector<1x8xf32> to vector<128x8xf32>
    %10 = arith.mulf %8, %9 : vector<128x8xf32>
    %11 = arith.addf %5, %10 : vector<128x8xf32>
    %c0_4 = arith.constant 0 : index
    %c0_5 = arith.constant 0 : index
    %12 = vector.load %arg3[%c0_4, %c0_5] : memref<128x1xf32, #tpu.memory_space<vmem>>, vector<128x1xf32>
    %13 = vector.broadcast %12 : vector<128x1xf32> to vector<128x8xf32>
    %14 = arith.addf %11, %13 : vector<128x8xf32>
    %15 = math.tanh %14 : vector<128x8xf32>
    %c0_6 = arith.constant 0 : index
    %c0_7 = arith.constant 0 : index
    %16 = vector.load %arg4[%c0_6, %c0_7] : memref<8x128xf32, #tpu.memory_space<vmem>>, vector<8x128xf32>
    %cst = arith.constant dense<0.000000e+00> : vector<8x8xf32>
    %17 = tpu.matmul %16, %15, %cst {dimension_numbers = #tpu.dot_dimension_numbers<[1], [0], [0], [1], [0, 0, 1, 1], [], []>} : vector<8x128xf32>, vector<128x8xf32>, vector<8x8xf32> -> vector<8x8xf32>
    %c0_8 = arith.constant 0 : index
    %c0_9 = arith.constant 0 : index
    %18 = vector.load %arg5[%c0_8, %c0_9] : memref<8x1xf32, #tpu.memory_space<vmem>>, vector<8x1xf32>
    %19 = vector.broadcast %18 : vector<8x1xf32> to vector<8x8xf32>
    %20 = arith.addf %17, %19 : vector<8x8xf32>
    %21 = tpu.iota {dimensions = array<i32: 0>} : vector<8x8xi32>
    %c4_i32 = arith.constant 4 : i32
    %22 = vector.broadcast %c4_i32 : i32 to vector<8x8xi32>
    %23 = arith.cmpi slt, %21, %22 : vector<8x8xi32>
    %cst_10 = arith.constant -1.000000e+30 : f32
    %24 = vector.broadcast %cst_10 : f32 to vector<8x8xf32>
    %25 = arith.select %23, %20, %24 : vector<8x8xi1>, vector<8x8xf32>
    %cst_11 = arith.constant dense<0xFF800000> : vector<8xf32>
    %26 = vector.multi_reduction <maximumf>, %25, %cst_11 [0] : vector<8x8xf32> to vector<8xf32>
    %27 = vector.shape_cast %26 : vector<8xf32> to vector<1x8xf32>
    %28 = vector.broadcast %27 : vector<1x8xf32> to vector<8x8xf32>
    %29 = arith.subf %25, %28 : vector<8x8xf32>
    %30 = math.exp %29 : vector<8x8xf32>
    %cst_12 = arith.constant dense<0.000000e+00> : vector<8xf32>
    %31 = vector.multi_reduction <add>, %30, %cst_12 [0] : vector<8x8xf32> to vector<8xf32>
    %32 = vector.shape_cast %31 : vector<8xf32> to vector<1x8xf32>
    %33 = math.log %32 : vector<1x8xf32>
    %34 = vector.broadcast %33 : vector<1x8xf32> to vector<8x8xf32>
    %35 = arith.subf %29, %34 : vector<8x8xf32>
    %36 = vector.extract_strided_slice %35 {offsets = [0, 0], sizes = [4, 8], strides = [1, 1]} : vector<8x8xf32> to vector<4x8xf32>
    %c0_13 = arith.constant 0 : index
    %c0_14 = arith.constant 0 : index
    %37 = vector.load %arg6[%c0_13, %c0_14] : memref<4x8xf32, #tpu.memory_space<vmem>>, vector<4x8xf32>
    tpu.vector_store %arg6[%c0_13, %c0_14], %36 {strides = array<i32>} : memref<4x8xf32, #tpu.memory_space<vmem>>, vector<4x8xf32>,
    %c4_i32_15 = arith.constant 4 : i32
    %38 = vector.broadcast %c4_i32_15 : i32 to vector<8x8xi32>
    %39 = arith.cmpi eq, %21, %38 : vector<8x8xi32>
    %cst_16 = arith.constant 0.000000e+00 : f32
    %40 = vector.broadcast %cst_16 : f32 to vector<8x8xf32>
    %41 = arith.select %39, %20, %40 : vector<8x8xi1>, vector<8x8xf32>
    %cst_17 = arith.constant dense<0.000000e+00> : vector<8xf32>
    %42 = vector.multi_reduction <add>, %41, %cst_17 [0] : vector<8x8xf32> to vector<8xf32>
    %43 = vector.shape_cast %42 : vector<8xf32> to vector<1x8xf32>
    %c0_18 = arith.constant 0 : index
    %c0_19 = arith.constant 0 : index
    %44 = vector.load %arg7[%c0_18, %c0_19] : memref<1x8xf32, #tpu.memory_space<vmem>>, vector<1x8xf32>
    tpu.vector_store %arg7[%c0_18, %c0_19], %43 {strides = array<i32>} : memref<1x8xf32, #tpu.memory_space<vmem>>, vector<1x8xf32>,
    return
  }
  func.func @transform_0(%arg0: i32) -> (i32, i32) {
    %c0_i32 = arith.constant 0 : i32
    %c0_i32_0 = arith.constant 0 : i32
    return %c0_i32, %arg0 : i32, i32
  }
  func.func @transform_1(%arg0: i32) -> (i32, i32) {
    %c0_i32 = arith.constant 0 : i32
    %c0_i32_0 = arith.constant 0 : i32
    %c0_i32_1 = arith.constant 0 : i32
    return %c0_i32, %c0_i32_0 : i32, i32
  }
  func.func @transform_2(%arg0: i32) -> (i32, i32) {
    %c0_i32 = arith.constant 0 : i32
    %c0_i32_0 = arith.constant 0 : i32
    %c0_i32_1 = arith.constant 0 : i32
    return %c0_i32, %c0_i32_0 : i32, i32
  }
  func.func @transform_3(%arg0: i32) -> (i32, i32) {
    %c0_i32 = arith.constant 0 : i32
    %c0_i32_0 = arith.constant 0 : i32
    %c0_i32_1 = arith.constant 0 : i32
    return %c0_i32, %c0_i32_0 : i32, i32
  }
  func.func @transform_4(%arg0: i32) -> (i32, i32) {
    %c0_i32 = arith.constant 0 : i32
    %c0_i32_0 = arith.constant 0 : i32
    %c0_i32_1 = arith.constant 0 : i32
    return %c0_i32, %c0_i32_0 : i32, i32
  }
  func.func @transform_5(%arg0: i32) -> (i32, i32) {
    %c0_i32 = arith.constant 0 : i32
    %c0_i32_0 = arith.constant 0 : i32
    return %c0_i32, %arg0 : i32, i32
  }
  func.func @transform_6(%arg0: i32) -> (i32, i32) {
    %c0_i32 = arith.constant 0 : i32
    %c0_i32_0 = arith.constant 0 : i32
    return %c0_i32, %arg0 : i32, i32
  }
}

</mosaic_0001>

<llo_original>
// kernel: acmodel_forward.1
$region0: #{acmodel_forward.1}
  #allocation0 [shape = 'u32[]', space=smem, size = 0x4, offset = 0x4, fixed_abs, tag = 'smem constant byte address 0x4 - core index']
  #allocation1 [shape = 'u32[144,128]{1,0:T(1,128)}', space=vmem, size = 0x12000, scoped, tag = 'internal scratch']
  %s0 = inlined_call_operand.vmem [shape: f32[2,8], index: 0, kind: input, shape index: {}]
  %s1 = inlined_call_operand.vmem [shape: f32[128,2], index: 1, kind: input, shape index: {}]
  %s2 = inlined_call_operand.vmem [shape: f32[128,1], index: 2, kind: input, shape index: {}]
  %s3 = inlined_call_operand.vmem [shape: f32[8,128], index: 3, kind: input, shape index: {}]
  %s4 = inlined_call_operand.vmem [shape: f32[8,1], index: 4, kind: input, shape index: {}]
  %s5 = inlined_call_operand.hbm [shape: f32[4,8], index: 5, kind: output, shape index: {0}]
  %s6 = inlined_call_operand.hbm [shape: f32[1,8], index: 6, kind: output, shape index: {1}]
  %7 = xla_tuple %s5, %s6
  %s8 = sld [smem:[#allocation0]]
  $region38: #{acmodel_forward.1} parent=0
    _
  %s10 = ssub.s32 1, %s8
  %s11 = scalar_select 0, %s10, %s8
  $region1: #{acmodel_forward.1} parent=0
    #allocation2 [shape = 'u8[2048]{0}', space=vmem, size = 0x800, scoped, tag = 'output window, operand 0, single buffered']
    #allocation3 [shape = 's32[1]{0}', space=sflag, size = 0x4, scoped, tag = 'scoped memory for acmodel_forward.1']
    #allocation4 [shape = 'u8[512]{0}', space=vmem, size = 0x400, scoped, tag = 'output window, operand 1, single buffered']
    #allocation5 [shape = 's32[1]{0}', space=sflag, size = 0x4, scoped, tag = 'scoped memory for acmodel_forward.1']
    %12 = vsyncpa [#allocation3], 0
    %13 = vsyncpa [#allocation5], 0
    // Predicated region
    $region2: #{acmodel_forward.1} parent=1 // pred_check
      _
    $region3: #{acmodel_forward.1} parent=1 // pred_check_branch
      %15 = sbr.rel (0) target = $region5
    $region4: #{acmodel_forward.1} parent=1 // pred_region
      _
    $region5: #{acmodel_forward.1} parent=1 // pred_fallthru
      _
    // Predicated region
    $region6: #{acmodel_forward.1} parent=1 // pred_check
      _
    $region7: #{acmodel_forward.1} parent=1 // pred_check_branch
      %17 = sbr.rel (0) target = $region9
    $region8: #{acmodel_forward.1} parent=1 // pred_region
      _
    $region9: #{acmodel_forward.1} parent=1 // pred_fallthru
      _
    // Predicated region
    $region10: #{acmodel_forward.1} parent=1 // pred_check
      _
    $region11: #{acmodel_forward.1} parent=1 // pred_check_branch
      %19 = sbr.rel (0) target = $region13
    $region12: #{acmodel_forward.1} parent=1 // pred_region
      _
    $region13: #{acmodel_forward.1} parent=1 // pred_fallthru
      _
    // Predicated region
    $region14: #{acmodel_forward.1} parent=1 // pred_check
      _
    $region15: #{acmodel_forward.1} parent=1 // pred_check_branch
      %21 = sbr.rel (0) target = $region17
    $region16: #{acmodel_forward.1} parent=1 // pred_region
      _
    $region17: #{acmodel_forward.1} parent=1 // pred_fallthru
      _
    // Predicated region
    $region18: #{acmodel_forward.1} parent=1 // pred_check
      _
    $region19: #{acmodel_forward.1} parent=1 // pred_check_branch
      %23 = sbr.rel (0) target = $region21
    $region20: #{acmodel_forward.1} parent=1 // pred_region
      _
    $region21: #{acmodel_forward.1} parent=1 // pred_fallthru
      _
    %v24 = vld [vmem:[%s0] sm:$0x3]
    %v25 = vld [vmem:[%s1] sm:$0xff]
    %v26 = vld [vmem:[%s1 + $0x8] sm:$0xff]
    %v27 = vld [vmem:[%s1 + $0x10] sm:$0xff]
    %v28 = vld [vmem:[%s1 + $0x18] sm:$0xff]
    %v29 = vld [vmem:[%s1 + $0x20] sm:$0xff]
    %v30 = vld [vmem:[%s1 + $0x28] sm:$0xff]
    %v31 = vld [vmem:[%s1 + $0x30] sm:$0xff]
    %v32 = vld [vmem:[%s1 + $0x38] sm:$0xff]
    %v33 = vld [vmem:[%s1 + $0x40] sm:$0xff]
    %v34 = vld [vmem:[%s1 + $0x48] sm:$0xff]
    %v35 = vld [vmem:[%s1 + $0x50] sm:$0xff]
    %v36 = vld [vmem:[%s1 + $0x58] sm:$0xff]
    %v37 = vld [vmem:[%s1 + $0x60] sm:$0xff]
    %v38 = vld [vmem:[%s1 + $0x68] sm:$0xff]
    %v39 = vld [vmem:[%s1 + $0x70] sm:$0xff]
    %v40 = vld [vmem:[%s1 + $0x78] sm:$0xff]
    %42 = vset.pattern.permute.xlu0 0
    %43 = vperm.xlu0 %42, %v25
    %v44 = vpop.permute.xlu0 %43
    %47 = vset.pattern.permute.xlu0 0
    %48 = vperm.xlu0 %47, %v26
    %v49 = vpop.permute.xlu0 %48
    %52 = vset.pattern.permute.xlu0 0
    %53 = vperm.xlu0 %52, %v27
    %v54 = vpop.permute.xlu0 %53
    %57 = vset.pattern.permute.xlu0 0
    %58 = vperm.xlu0 %57, %v28
    %v59 = vpop.permute.xlu0 %58
    %62 = vset.pattern.permute.xlu0 0
    %63 = vperm.xlu0 %62, %v29
    %v64 = vpop.permute.xlu0 %63
    %67 = vset.pattern.permute.xlu0 0
    %68 = vperm.xlu0 %67, %v30
    %v69 = vpop.permute.xlu0 %68
    %72 = vset.pattern.permute.xlu0 0
    %73 = vperm.xlu0 %72, %v31
    %v74 = vpop.permute.xlu0 %73
    %77 = vset.pattern.permute.xlu0 0
    %78 = vperm.xlu0 %77, %v32
    %v79 = vpop.permute.xlu0 %78
    %82 = vset.pattern.permute.xlu0 0
    %83 = vperm.xlu0 %82, %v33
    %v84 = vpop.permute.xlu0 %83
    %87 = vset.pattern.permute.xlu0 0
    %88 = vperm.xlu0 %87, %v34
    %v89 = vpop.permute.xlu0 %88
    %92 = vset.pattern.permute.xlu0 0
    %93 = vperm.xlu0 %92, %v35
    %v94 = vpop.permute.xlu0 %93
    %97 = vset.pattern.permute.xlu0 0
    %98 = vperm.xlu0 %97, %v36
    %v99 = vpop.permute.xlu0 %98
    %102 = vset.pattern.permute.xlu0 0
    %103 = vperm.xlu0 %102, %v37
    %v104 = vpop.permute.xlu0 %103
    %107 = vset.pattern.permute.xlu0 0
    %108 = vperm.xlu0 %107, %v38
    %v109 = vpop.permute.xlu0 %108
    %112 = vset.pattern.permute.xlu0 0
    %113 = vperm.xlu0 %112, %v39
    %v114 = vpop.permute.xlu0 %113
    %117 = vset.pattern.permute.xlu0 0
    %118 = vperm.xlu0 %117, %v40
    %v119 = vpop.permute.xlu0 %118
    %v121 = vlaneseq
    %v122 = vshrl.u32 %v121, 7
    %v123 = vsub.s32 0, %v122
    %v124 = vrot.slane %v24, %v123
    %v125 = vmul.f32 %v44, %v124
    %v126 = vmul.f32 %v49, %v124
    %v127 = vmul.f32 %v54, %v124
    %v128 = vmul.f32 %v59, %v124
    %v129 = vmul.f32 %v64, %v124
    %v130 = vmul.f32 %v69, %v124
    %v131 = vmul.f32 %v74, %v124
    %v132 = vmul.f32 %v79, %v124
    %v133 = vmul.f32 %v84, %v124
    %v134 = vmul.f32 %v89, %v124
    %v135 = vmul.f32 %v94, %v124
    %v136 = vmul.f32 %v99, %v124
    %v137 = vmul.f32 %v104, %v124
    %v138 = vmul.f32 %v109, %v124
    %v139 = vmul.f32 %v114, %v124
    %v140 = vmul.f32 %v119, %v124
    %141 = vset.pattern.permute.xlu0 1
    %142 = vperm.xlu0 %141, %v25
    %v143 = vpop.permute.xlu0 %142
    %145 = vset.pattern.permute.xlu0 1
    %146 = vperm.xlu0 %145, %v26
    %v147 = vpop.permute.xlu0 %146
    %149 = vset.pattern.permute.xlu0 1
    %150 = vperm.xlu0 %149, %v27
    %v151 = vpop.permute.xlu0 %150
    %153 = vset.pattern.permute.xlu0 1
    %154 = vperm.xlu0 %153, %v28
    %v155 = vpop.permute.xlu0 %154
    %157 = vset.pattern.permute.xlu0 1
    %158 = vperm.xlu0 %157, %v29
    %v159 = vpop.permute.xlu0 %158
    %161 = vset.pattern.permute.xlu0 1
    %162 = vperm.xlu0 %161, %v30
    %v163 = vpop.permute.xlu0 %162
    %165 = vset.pattern.permute.xlu0 1
    %166 = vperm.xlu0 %165, %v31
    %v167 = vpop.permute.xlu0 %166
    %169 = vset.pattern.permute.xlu0 1
    %170 = vperm.xlu0 %169, %v32
    %v171 = vpop.permute.xlu0 %170
    %173 = vset.pattern.permute.xlu0 1
    %174 = vperm.xlu0 %173, %v33
    %v175 = vpop.permute.xlu0 %174
    %177 = vset.pattern.permute.xlu0 1
    %178 = vperm.xlu0 %177, %v34
    %v179 = vpop.permute.xlu0 %178
    %181 = vset.pattern.permute.xlu0 1
    %182 = vperm.xlu0 %181, %v35
    %v183 = vpop.permute.xlu0 %182
    %185 = vset.pattern.permute.xlu0 1
    %186 = vperm.xlu0 %185, %v36
    %v187 = vpop.permute.xlu0 %186
    %189 = vset.pattern.permute.xlu0 1
    %190 = vperm.xlu0 %189, %v37
    %v191 = vpop.permute.xlu0 %190
    %193 = vset.pattern.permute.xlu0 1
    %194 = vperm.xlu0 %193, %v38
    %v195 = vpop.permute.xlu0 %194
    %197 = vset.pattern.permute.xlu0 1
    %198 = vperm.xlu0 %197, %v39
    %v199 = vpop.permute.xlu0 %198
    %201 = vset.pattern.permute.xlu0 1
    %202 = vperm.xlu0 %201, %v40
    %v203 = vpop.permute.xlu0 %202
    %v205 = vlaneseq
    %v206 = vshrl.u32 %v205, 7
    %v207 = vsub.s32 1, %v206
    %v208 = vrot.slane %v24, %v207
    %v209 = vmul.f32 %v143, %v208
    %v210 = vmul.f32 %v147, %v208
    %v211 = vmul.f32 %v151, %v208
    %v212 = vmul.f32 %v155, %v208
    %v213 = vmul.f32 %v159, %v208
    %v214 = vmul.f32 %v163, %v208
    %v215 = vmul.f32 %v167, %v208
    %v216 = vmul.f32 %v171, %v208
    %v217 = vmul.f32 %v175, %v208
    %v218 = vmul.f32 %v179, %v208
    %v219 = vmul.f32 %v183, %v208
    %v220 = vmul.f32 %v187, %v208
    %v221 = vmul.f32 %v191, %v208
    %v222 = vmul.f32 %v195, %v208
    %v223 = vmul.f32 %v199, %v208
    %v224 = vmul.f32 %v203, %v208
    %v225 = vadd.f32 %v125, %v209
    %v226 = vadd.f32 %v126, %v210
    %v227 = vadd.f32 %v127, %v211
    %v228 = vadd.f32 %v128, %v212
    %v229 = vadd.f32 %v129, %v213
    %v230 = vadd.f32 %v130, %v214
    %v231 = vadd.f32 %v131, %v215
    %v232 = vadd.f32 %v132, %v216
    %v233 = vadd.f32 %v133, %v217
    %v234 = vadd.f32 %v134, %v218
    %v235 = vadd.f32 %v135, %v219
    %v236 = vadd.f32 %v136, %v220
    %v237 = vadd.f32 %v137, %v221
    %v238 = vadd.f32 %v138, %v222
    %v239 = vadd.f32 %v139, %v223
    %v240 = vadd.f32 %v140, %v224
    %v241 = vld [vmem:[%s2] sm:$0xff]
    %v242 = vld [vmem:[%s2 + $0x8] sm:$0xff]
    %v243 = vld [vmem:[%s2 + $0x10] sm:$0xff]
    %v244 = vld [vmem:[%s2 + $0x18] sm:$0xff]
    %v245 = vld [vmem:[%s2 + $0x20] sm:$0xff]
    %v246 = vld [vmem:[%s2 + $0x28] sm:$0xff]
    %v247 = vld [vmem:[%s2 + $0x30] sm:$0xff]
    %v248 = vld [vmem:[%s2 + $0x38] sm:$0xff]
    %v249 = vld [vmem:[%s2 + $0x40] sm:$0xff]
    %v250 = vld [vmem:[%s2 + $0x48] sm:$0xff]
    %v251 = vld [vmem:[%s2 + $0x50] sm:$0xff]
    %v252 = vld [vmem:[%s2 + $0x58] sm:$0xff]
    %v253 = vld [vmem:[%s2 + $0x60] sm:$0xff]
    %v254 = vld [vmem:[%s2 + $0x68] sm:$0xff]
    %v255 = vld [vmem:[%s2 + $0x70] sm:$0xff]
    %v256 = vld [vmem:[%s2 + $0x78] sm:$0xff]
    %258 = vset.pattern.permute.xlu0 0
    %259 = vperm.xlu0 %258, %v241
    %v260 = vpop.permute.xlu0 %259
    %263 = vset.pattern.permute.xlu0 0
    %264 = vperm.xlu0 %263, %v242
    %v265 = vpop.permute.xlu0 %264
    %268 = vset.pattern.permute.xlu0 0
    %269 = vperm.xlu0 %268, %v243
    %v270 = vpop.permute.xlu0 %269
    %273 = vset.pattern.permute.xlu0 0
    %274 = vperm.xlu0 %273, %v244
    %v275 = vpop.permute.xlu0 %274
    %278 = vset.pattern.permute.xlu0 0
    %279 = vperm.xlu0 %278, %v245
    %v280 = vpop.permute.xlu0 %279
    %283 = vset.pattern.permute.xlu0 0
    %284 = vperm.xlu0 %283, %v246
    %v285 = vpop.permute.xlu0 %284
    %288 = vset.pattern.permute.xlu0 0
    %289 = vperm.xlu0 %288, %v247
    %v290 = vpop.permute.xlu0 %289
    %293 = vset.pattern.permute.xlu0 0
    %294 = vperm.xlu0 %293, %v248
    %v295 = vpop.permute.xlu0 %294
    %298 = vset.pattern.permute.xlu0 0
    %299 = vperm.xlu0 %298, %v249
    %v300 = vpop.permute.xlu0 %299
    %303 = vset.pattern.permute.xlu0 0
    %304 = vperm.xlu0 %303, %v250
    %v305 = vpop.permute.xlu0 %304
    %308 = vset.pattern.permute.xlu0 0
    %309 = vperm.xlu0 %308, %v251
    %v310 = vpop.permute.xlu0 %309
    %313 = vset.pattern.permute.xlu0 0
    %314 = vperm.xlu0 %313, %v252
    %v315 = vpop.permute.xlu0 %314
    %318 = vset.pattern.permute.xlu0 0
    %319 = vperm.xlu0 %318, %v253
    %v320 = vpop.permute.xlu0 %319
    %323 = vset.pattern.permute.xlu0 0
    %324 = vperm.xlu0 %323, %v254
    %v325 = vpop.permute.xlu0 %324
    %328 = vset.pattern.permute.xlu0 0
    %329 = vperm.xlu0 %328, %v255
    %v330 = vpop.permute.xlu0 %329
    %333 = vset.pattern.permute.xlu0 0
    %334 = vperm.xlu0 %333, %v256
    %v335 = vpop.permute.xlu0 %334
    %v337 = vadd.f32 %v225, %v260
    %v338 = vadd.f32 %v226, %v265
    %v339 = vadd.f32 %v227, %v270
    %v340 = vadd.f32 %v228, %v275
    %v341 = vadd.f32 %v229, %v280
    %v342 = vadd.f32 %v230, %v285
    %v343 = vadd.f32 %v231, %v290
    %v344 = vadd.f32 %v232, %v295
    %v345 = vadd.f32 %v233, %v300
    %v346 = vadd.f32 %v234, %v305
    %v347 = vadd.f32 %v235, %v310
    %v348 = vadd.f32 %v236, %v315
    %v349 = vadd.f32 %v237, %v320
    %v350 = vadd.f32 %v238, %v325
    %v351 = vadd.f32 %v239, %v330
    %v352 = vadd.f32 %v240, %v335
    %v353 = vtanh.pop %v337
    %v354 = vtanh.pop %v338
    %v355 = vtanh.pop %v339
    %v356 = vtanh.pop %v340
    %v357 = vtanh.pop %v341
    %v358 = vtanh.pop %v342
    %v359 = vtanh.pop %v343
    %v360 = vtanh.pop %v344
    %v361 = vtanh.pop %v345
    %v362 = vtanh.pop %v346
    %v363 = vtanh.pop %v347
    %v364 = vtanh.pop %v348
    %v365 = vtanh.pop %v349
    %v366 = vtanh.pop %v350
    %v367 = vtanh.pop %v351
    %v368 = vtanh.pop %v352
    %v369 = vld [vmem:[%s3] sm:$0xff]
    %v370 = vld [vmem:[%s4] sm:$0xff]
    %372 = vset.pattern.permute.xlu0 0
    %373 = vperm.xlu0 %372, %v370
    %v374 = vpop.permute.xlu0 %373
    %376 = vmatprep.subr.mxu0 0.0
    %377 = vmatpush1.msra.mxu0 %v353
    %378 = vmatprep.subr.mxu0 0.0
    %379 = vmatpush1.msra.mxu0 %v354
    %380 = vmatprep.subr.mxu0 0.0
    %381 = vmatpush1.msra.mxu0 %v355
    %382 = vmatprep.subr.mxu0 0.0
    %383 = vmatpush1.msra.mxu0 %v356
    %384 = vmatprep.subr.mxu0 0.0
    %385 = vmatpush1.msra.mxu0 %v357
    %386 = vmatprep.subr.mxu0 0.0
    %387 = vmatpush1.msra.mxu0 %v358
    %388 = vmatprep.subr.mxu0 0.0
    %389 = vmatpush1.msra.mxu0 %v359
    %390 = vmatprep.subr.mxu0 0.0
    %391 = vmatpush1.msra.mxu0 %v360
    %392 = vmatprep.subr.mxu0 0.0
    %393 = vmatpush1.msra.mxu0 %v361
    %394 = vmatprep.subr.mxu0 0.0
    %395 = vmatpush1.msra.mxu0 %v362
    %396 = vmatprep.subr.mxu0 0.0
    %397 = vmatpush1.msra.mxu0 %v363
    %398 = vmatprep.subr.mxu0 0.0
    %399 = vmatpush1.msra.mxu0 %v364
    %400 = vmatprep.subr.mxu0 0.0
    %401 = vmatpush1.msra.mxu0 %v365
    %402 = vmatprep.subr.mxu0 0.0
    %403 = vmatpush1.msra.mxu0 %v366
    %404 = vmatprep.subr.mxu0 0.0
    %405 = vmatpush1.msra.mxu0 %v367
    %406 = vmatprep.subr.mxu0 0.0
    %407 = vmatpush1.msra.mxu0 %v368
    %408 = vmatprep.subr.mxu0 0.0
    %409 = vmatpush1.msra.mxu0 0.0
    %410 = vmatprep.subr.mxu0 0.0
    %411 = vmatpush1.msra.mxu0 0.0
    %412 = vmatprep.subr.mxu0 0.0
    %413 = vmatpush1.msra.mxu0 0.0
    %414 = vmatprep.subr.mxu0 0.0
    %415 = vmatpush1.msra.mxu0 0.0
    %416 = vmatprep.subr.mxu0 0.0
    %417 = vmatpush1.msra.mxu0 0.0
    %418 = vmatprep.subr.mxu0 0.0
    %419 = vmatpush1.msra.mxu0 0.0
    %420 = vmatprep.subr.mxu0 0.0
    %421 = vmatpush1.msra.mxu0 0.0
    %422 = vmatprep.subr.mxu0 0.0
    %423 = vmatpush1.msra.mxu0 0.0
    %424 = vmatprep.subr.mxu0 0.0
    %425 = vmatpush1.msra.mxu0 0.0
    %426 = vmatprep.subr.mxu0 0.0
    %427 = vmatpush1.msra.mxu0 0.0
    %428 = vmatprep.subr.mxu0 0.0
    %429 = vmatpush1.msra.mxu0 0.0
    %430 = vmatprep.subr.mxu0 0.0
    %431 = vmatpush1.msra.mxu0 0.0
    %432 = vmatprep.subr.mxu0 0.0
    %433 = vmatpush1.msra.mxu0 0.0
    %434 = vmatprep.subr.mxu0 0.0
    %435 = vmatpush1.msra.mxu0 0.0
    %436 = vmatprep.subr.mxu0 0.0
    %437 = vmatpush1.msra.mxu0 0.0
    %438 = vmatprep.subr.mxu0 0.0
    %439 = vmatpush1.msra.mxu0 0.0
    %440 = vmatprep.mubr.f32.mxu0 0.0
    %441 = vmatmul.mubr.f32.gmra.mrb[0].mxu0 %v369
    %v442 = vpop.f32.mrb[0].mxu0
    %v443 = vadd.f32 %v374, %v442
    %v444 = vpop.f32.mrb[0].mxu0
    %445 = vdwg.mxu0
    %v446 = vlaneseq
    %v447 = vshrl.u32 %v446, 7
    %vm448 = vcmp.lt.s32.totalorder %v447, 4
    %v449 = vsel %vm448, %v443, -1e+30
    %vm450 = vcmask 64512
    %v451 = vsel %vm450, %v449, -inf
    %v452 = vrot.slane %v451, 4
    %v453 = vmax.f32 %v451, %v452
    %v454 = vrot.slane %v453, 2
    %v455 = vmax.f32 %v453, %v454
    %v456 = vrot.slane %v455, 1
    %v457 = vmax.f32 %v455, %v456
    %v458 = vsub.f32 %v449, %v457
    %v459 = vmul.f32 %v458, 1.442695
    %v460 = vpow.pop %v459
    %v461 = vsel %vm450, %v460, 0.0
    %v462 = vrot.slane %v461, 4
    %v463 = vadd.f32 %v461, %v462
    %v464 = vrot.slane %v463, 2
    %v465 = vadd.f32 %v463, %v464
    %v466 = vrot.slane %v465, 1
    %v467 = vadd.f32 %v465, %v466
    %v468 = vlog2.pop %v467
    %v469 = vmul.f32 %v468, 0.6931472
    %v470 = vsub.f32 %v458, %v469
    %vm471 = vcmask 60416
    %472 = vst.msk [vmem:[#allocation2] sm:$0xf] %vm471, %v470
    %vm473 = vcmp.eq.s32.totalorder %v447, 4
    %v474 = vsel %vm473, %v443, 0.0
    %v475 = vsel %vm450, %v474, 0.0
    %v476 = vrot.slane %v475, 4
    %v477 = vadd.f32 %v475, %v476
    %v478 = vrot.slane %v477, 2
    %v479 = vadd.f32 %v477, %v478
    %v480 = vrot.slane %v479, 1
    %v481 = vadd.f32 %v479, %v480
    %vm482 = vcmask 57344
    %483 = vst.msk [vmem:[#allocation4] sm:$0x1] %vm482, %v481
    // Predicated region
    $region22: #{acmodel_forward.1} parent=1 // pred_check
      _
    $region23: #{acmodel_forward.1} parent=1 // pred_check_branch
      %485 = sbr.rel (0) target = $region25
    $region24: #{acmodel_forward.1} parent=1 // pred_region
      %s487 = ssub.s32 64, 64
      %488 = vsyncadd [#allocation3], %s487
      %s490 = sshll.u32 [#allocation2], 4
      %s491 = int_to_ptr.vmem [resolvable:$true] %s490
      %493 = dma.vmem_to_hbm [thread:$0]  %s491, 64, %s5, [#allocation3]
    $region25: #{acmodel_forward.1} parent=1 // pred_fallthru
      _
    // Predicated region
    $region26: #{acmodel_forward.1} parent=1 // pred_check
      _
    $region27: #{acmodel_forward.1} parent=1 // pred_check_branch
      %495 = sbr.rel (0) target = $region29
    $region28: #{acmodel_forward.1} parent=1 // pred_region
      %s497 = ssub.s32 16, 16
      %498 = vsyncadd [#allocation5], %s497
      %s500 = sshll.u32 [#allocation4], 4
      %s501 = int_to_ptr.vmem [resolvable:$true] %s500
      %503 = dma.vmem_to_hbm [thread:$0]  %s501, 16, %s6, [#allocation5]
    $region29: #{acmodel_forward.1} parent=1 // pred_fallthru
      _
    // Predicated region
    $region30: #{acmodel_forward.1} parent=1 // pred_check
      _
    $region31: #{acmodel_forward.1} parent=1 // pred_check_branch
      %505 = sbr.rel (0) target = $region33
    $region32: #{acmodel_forward.1} parent=1 // pred_region
      %506 = dma.done [#allocation3], 64
    $region33: #{acmodel_forward.1} parent=1 // pred_fallthru
      _
    // Predicated region
    $region34: #{acmodel_forward.1} parent=1 // pred_check
      _
    $region35: #{acmodel_forward.1} parent=1 // pred_check_branch
      %508 = sbr.rel (0) target = $region37
    $region36: #{acmodel_forward.1} parent=1 // pred_region
      %509 = dma.done [#allocation5], 16
    $region37: #{acmodel_forward.1} parent=1 // pred_fallthru
      _
    %510 = vsyncpa [#allocation3], 1
    %511 = vsyncpa [#allocation5], 1

</llo_original>
